<compile_context>
chip_gen: v5e
topology: v5e:2x2
jax: 0.10.0
libtpu: 0.0.40
codegen_flags: <defaults>
</compile_context>

<pallas_src>
import functools

import jax
import jax.numpy as jnp
from jax.experimental import pallas as pl
from jax.experimental.pallas import tpu as pltpu


def _cdiv(a, b):
    return -(-a // b)


def _round_up(x, m):
    return ((x + m - 1) // m) * m


def _default_vmem_limit_bytes():
    """~half of physical VMEM, capped at 64 MiB (v5e/v6e: 64 MiB, v7x: 32 MiB)."""
    cap = 128 * 1024 * 1024
    try:
        info = pltpu.get_tpu_info()
        cap = int(getattr(info, "vmem_capacity_bytes", cap))
    except Exception:
        pass
    return min(max(cap // 2, 16 * 1024 * 1024), 64 * 1024 * 1024)


def _focal_loss_block(x, t, w, *, gamma, alpha, hard_targets):
    """Elementwise focal loss for one (TM, TC) block; computed in f32."""
    p = jnp.clip(x.astype(jnp.float32), 1e-6, 1.0 - 1e-6)
    t = t.astype(jnp.float32)

    is_pos = (t == 1.0)
    pt = jnp.where(is_pos, p, 1.0 - p)
    one_m_pt = 1.0 - pt

    if hard_targets:
        # Valid only for hard 0/1 labels: BCE = -log(pt) (one log instead of two).
        bce = -jnp.log(pt)
    else:
        bce = -(t * jnp.log(p) + (1.0 - t) * jnp.log(1.0 - p))
    if w is not None:
        bce = bce * w.astype(jnp.float32)        # (1, TC) broadcasts over rows

    # Focal weight: specialize integer gamma (default 2.0) to plain VPU
    # multiplies instead of pow() -> exp(gamma*log(x)) on the single EUP.
    g_int = int(gamma)
    if float(g_int) == float(gamma) and 0 <= g_int <= 8:
        if g_int == 0:
            fw = jnp.ones_like(one_m_pt)
        else:
            fw = one_m_pt
            for _ in range(g_int - 1):
                fw = fw * one_m_pt
    else:
        fw = jnp.power(one_m_pt, jnp.float32(gamma))

    if alpha is not None:
        fw = fw * jnp.where(is_pos, jnp.float32(alpha), jnp.float32(1.0 - alpha))
    return fw * bce


def _focal_loss_psum_kernel(*refs, gamma, alpha, hard_targets, has_w,
                            n_rows, n_cols, block_rows, block_cols,
                            mask_rows, mask_cols):
    """Per-block focal loss -> per-lane partial row sums (no serial accumulator)."""
    if has_w:
        x_ref, t_ref, w_ref, psum_ref = refs
        w = w_ref[...]
    else:
        x_ref, t_ref, psum_ref = refs
        w = None

    loss = _focal_loss_block(x_ref[...], t_ref[...], w,
                             gamma=gamma, alpha=alpha, hard_targets=hard_targets)

    # Zero out padded (stale-VMEM) rows/cols with a NaN-safe select.  Masks are
    # only emitted when padding exists; interior blocks compare against limits
    # >= block size so every lane passes.  Cheap VPU work, hidden when mem-bound.
    if mask_rows or mask_cols:
        valid = None
        if mask_rows:
            rows = jax.lax.broadcasted_iota(jnp.int32, loss.shape, 0)
            row_limit = n_rows - pl.program_id(0) * block_rows
            valid = rows < row_limit
        if mask_cols:
            cols = jax.lax.broadcasted_iota(jnp.int32, loss.shape, 1)
            col_limit = n_cols - pl.program_id(1) * block_cols
            cvalid = cols < col_limit
            valid = cvalid if valid is None else (valid & cvalid)
        loss = jnp.where(valid, loss, 0.0)

    # (1, 1, TC) lane-dense partial sum; cross-lane reduce happens outside.
    psum_ref[...] = loss.sum(axis=0, keepdims=True)[None]


def _focal_loss_none_kernel(*refs, gamma, alpha, hard_targets, has_w):
    """Elementwise focal loss (reduction='none'); edge writes masked by Pallas."""
    if has_w:
        x_ref, t_ref, w_ref, o_ref = refs
        w = w_ref[...]
    else:
        x_ref, t_ref, o_ref = refs
        w = None
    o_ref[...] = _focal_loss_block(
        x_ref[...], t_ref[...], w,
        gamma=gamma, alpha=alpha, hard_targets=hard_targets).astype(o_ref.dtype)


def focal_loss(inputs, targets, *, alpha=None, gamma=2.0, pos_weight=None,
               reduction='mean', hard_targets=False,
               block_rows=None, block_cols=None, vmem_limit_bytes=None):
    """Pallas TPU focal loss.

    inputs/targets: [N, C] arrays of probabilities / labels (any float dtype;
    pass bf16 to halve HBM read traffic -- compute is always f32).
    Set hard_targets=True only if targets are guaranteed hard 0/1 labels.
    """
    N, C = inputs.shape
    assert targets.shape == (N, C)

    out_none = reduction not in ('mean', 'sum')
    out_dtype = inputs.dtype

    if vmem_limit_bytes is None:
        vmem_limit_bytes = _default_vmem_limit_bytes()
    # Double-buffered working-set budget: leave headroom for output buffers and
    # the in-kernel f32 upcast / compute temporaries.
    budget = (vmem_limit_bytes * 3) // 4

    # ---- Tile sizes (no wrapper padding; Pallas handles partial edge blocks). ----
    C_128 = _round_up(C, 128)
    if block_cols is None:
        bc = min(C_128, 2048)                      # tile class axis when C is large
    else:
        bc = min(max(128, _round_up(block_cols, 128)), C_128)
    n_col_blocks = _cdiv(C, bc)

    in_bytes = (jnp.dtype(inputs.dtype).itemsize
                + jnp.dtype(targets.dtype).itemsize)
    out_bytes = jnp.dtype(out_dtype).itemsize if out_none else 0
    # 2x for double buffering; +4 bytes/elem headroom for f32 temporaries.
    per_elem = 2 * (in_bytes + out_bytes) + 4
    if block_rows is None:
        br = budget // (per_elem * bc)
        br = max(8, (br // 8) * 8)
    else:
        br = max(8, _round_up(block_rows, 8))
    br = min(br, _round_up(N, 8))
    # v7x shards 'parallel' grid axes across its 2 TensorCores: when the class
    # axis fits in one block, make sure there are >= 2 row programs if possible.
    if n_col_blocks == 1 and br >= _round_up(N, 8) and N > 8:
        br = _round_up(_cdiv(N, 2), 8)
    n_row_blocks = _cdiv(N, br)
    grid = (n_row_blocks, n_col_blocks)

    mask_rows = (N % br) != 0
    mask_cols = (C % bc) != 0

    # pos_weight operand only when actually used (saves a per-step 1xbc DMA).
    has_w = pos_weight is not None
    args = [inputs, targets]
    in_specs = [
        pl.BlockSpec((br, bc), lambda i, j: (i, j)),
        pl.BlockSpec((br, bc), lambda i, j: (i, j)),
    ]
    if has_w:
        w = jnp.broadcast_to(jnp.asarray(pos_weight, jnp.float32), (1, C))
        args.append(w)
        in_specs.append(pl.BlockSpec((1, bc), lambda i, j: (0, j)))

    cparams = pltpu.CompilerParams(
        dimension_semantics=("parallel", "parallel"),
        vmem_limit_bytes=vmem_limit_bytes)

    if reduction in ('mean', 'sum'):
        kernel = functools.partial(
            _focal_loss_psum_kernel, gamma=gamma, alpha=alpha,
            hard_targets=hard_targets, has_w=has_w,
            n_rows=N, n_cols=C, block_rows=br, block_cols=bc,
            mask_rows=mask_rows, mask_cols=mask_cols)
        # Lane-dense partial-sum output; padded lanes are written as exact zeros.
        psums = pl.pallas_call(
            kernel,
            out_shape=jax.ShapeDtypeStruct(
                (n_row_blocks, 1, n_col_blocks * bc), jnp.float32),
            grid_spec=pltpu.PrefetchScalarGridSpec(
                num_scalar_prefetch=0,
                grid=grid,
                in_specs=in_specs,
                out_specs=pl.BlockSpec((1, 1, bc), lambda i, j: (i, 0, j)),
            ),
            compiler_params=cparams,
        )(*args)
        total = jnp.sum(psums)                     # tiny final cross-lane reduce
        if reduction == 'mean':
            return total / jnp.float32(N * C)
        return total
    else:  # reduction == 'none'
        kernel = functools.partial(
            _focal_loss_none_kernel, gamma=gamma, alpha=alpha,
            hard_targets=hard_targets, has_w=has_w)
        return pl.pallas_call(
            kernel,
            out_shape=jax.ShapeDtypeStruct((N, C), out_dtype),
            grid_spec=pltpu.PrefetchScalarGridSpec(
                num_scalar_prefetch=0,
                grid=grid,
                in_specs=in_specs,
                out_specs=pl.BlockSpec((br, bc), lambda i, j: (i, j)),
            ),
            compiler_params=cparams,
        )(*args)


def focal_loss_ref(inputs, targets, *, alpha=None, gamma=2.0, pos_weight=None,
                   reduction='mean'):
    """Pure-JAX reference matching the PyTorch module."""
    p = jnp.clip(inputs.astype(jnp.float32), 1e-6, 1.0 - 1e-6)
    t = targets.astype(jnp.float32)
    bce = -(t * jnp.log(p) + (1.0 - t) * jnp.log(1.0 - p))
    if pos_weight is not None:
        bce = bce * jnp.asarray(pos_weight, jnp.float32)
    pt = jnp.where(t == 1.0, p, 1.0 - p)
    fw = (1.0 - pt) ** gamma
    if alpha is not None:
        fw = fw * jnp.where(t == 1.0, alpha, 1.0 - alpha)
    loss = fw * bce
    if reduction == 'mean':
        return loss.mean()
    if reduction == 'sum':
        return loss.sum()
    return loss


if __name__ == "__main__":
    key = jax.random.PRNGKey(0)
    k1, k2, k3, k4 = jax.random.split(key, 4)

    # --- Default module config: alpha=None, gamma=2.0, pos_weight=None, mean ---
    N, C = 16, 128
    logits = jax.random.normal(k1, (N, C), jnp.float32)
    inputs = jax.nn.sigmoid(logits)                      # probabilities in (0,1)
    targets = (jax.random.uniform(k2, (N, C)) > 0.5).astype(jnp.float32)

    out = focal_loss(inputs, targets, alpha=None, gamma=2.0,
                     pos_weight=None, reduction='mean')
    out = jax.block_until_ready(out)
    ref = focal_loss_ref(inputs, targets, alpha=None, gamma=2.0,
                         pos_weight=None, reduction='mean')
    assert jnp.allclose(out, ref, rtol=1e-5, atol=1e-6), (out, ref)

    # --- alpha-weighted, reduction='none' (no wrapper pad / output slice) ---
    out_none = focal_loss(inputs, targets, alpha=0.25, gamma=2.0, reduction='none')
    ref_none = focal_loss_ref(inputs, targets, alpha=0.25, gamma=2.0,
                              reduction='none')
    assert jnp.allclose(jax.block_until_ready(out_none), ref_none,
                        rtol=1e-5, atol=1e-6)

    # --- non-aligned shape (partial edge blocks + in-kernel masking) + sum ---
    N2, C2 = 10, 200
    p2 = jax.nn.sigmoid(jax.random.normal(k3, (N2, C2), jnp.float32))
    t2 = (jax.random.uniform(k4, (N2, C2)) > 0.5).astype(jnp.float32)
    pw = jnp.linspace(0.5, 2.0, C2, dtype=jnp.float32)
    out2 = focal_loss(p2, t2, alpha=0.5, gamma=2.0, pos_weight=pw,
                      reduction='sum')
    ref2 = focal_loss_ref(p2, t2, alpha=0.5, gamma=2.0, pos_weight=pw,
                          reduction='sum')
    assert jnp.allclose(jax.block_until_ready(out2), ref2, rtol=1e-5, atol=1e-5)

    # --- hard-label fast path (single log) + bf16 operands (halved HBM reads) ---
    out3 = focal_loss(inputs.astype(jnp.bfloat16), targets.astype(jnp.bfloat16),
                      gamma=2.0, reduction='mean', hard_targets=True)
    ref3 = focal_loss_ref(inputs.astype(jnp.bfloat16), targets, gamma=2.0,
                          reduction='mean')
    assert jnp.allclose(jax.block_until_ready(out3), ref3, rtol=1e-4, atol=1e-5)

    print("KERNEL_OK")
</pallas_src>

<mosaic_0001>
module attributes {stable_mosaic.version = 11 : i64} {
  func.func @_focal_loss_psum_kernel(%arg0: i32, %arg1: i32, %arg2: memref<8x128xf32, #tpu.memory_space<vmem>>, %arg3: memref<8x128xf32, #tpu.memory_space<vmem>>, %arg4: memref<1x1x128xf32, #tpu.memory_space<vmem>>) attributes {dimension_semantics = [#tpu.dimension_semantics<parallel>, #tpu.dimension_semantics<parallel>], iteration_bounds = array<i64: 2, 1>, scalar_prefetch = 0 : i64, scratch_operands = 0 : i64, tpu.core_type = #tpu.core_type<tc>, window_params = [{transform_indices = @transform_0, window_bounds = array<i64: 8, 128>}, {transform_indices = @transform_1, window_bounds = array<i64: 8, 128>}, {transform_indices = @transform_2, window_bounds = array<i64: 1, 1, 128>}]} {
    %c0 = arith.constant 0 : index
    %c0_0 = arith.constant 0 : index
    %0 = vector.load %arg2[%c0, %c0_0] : memref<8x128xf32, #tpu.memory_space<vmem>>, vector<8x128xf32>
    %c0_1 = arith.constant 0 : index
    %c0_2 = arith.constant 0 : index
    %1 = vector.load %arg3[%c0_1, %c0_2] : memref<8x128xf32, #tpu.memory_space<vmem>>, vector<8x128xf32>
    %cst = arith.constant 9.99999997E-7 : f32
    %cst_3 = arith.constant 0.999998986 : f32
    %2 = vector.broadcast %cst : f32 to vector<8x128xf32>
    %3 = arith.maximumf %2, %0 : vector<8x128xf32>
    %4 = vector.broadcast %cst_3 : f32 to vector<8x128xf32>
    %5 = arith.minimumf %4, %3 : vector<8x128xf32>
    %cst_4 = arith.constant 1.000000e+00 : f32
    %6 = vector.broadcast %cst_4 : f32 to vector<8x128xf32>
    %7 = arith.cmpf oeq, %1, %6 : vector<8x128xf32>
    %cst_5 = arith.constant 1.000000e+00 : f32
    %8 = vector.broadcast %cst_5 : f32 to vector<8x128xf32>
    %9 = arith.subf %8, %5 : vector<8x128xf32>
    %10 = arith.select %7, %5, %9 : vector<8x128xi1>, vector<8x128xf32>
    %cst_6 = arith.constant 1.000000e+00 : f32
    %11 = vector.broadcast %cst_6 : f32 to vector<8x128xf32>
    %12 = arith.subf %11, %10 : vector<8x128xf32>
    %13 = math.log %5 : vector<8x128xf32>
    %14 = arith.mulf %1, %13 : vector<8x128xf32>
    %cst_7 = arith.constant 1.000000e+00 : f32
    %15 = vector.broadcast %cst_7 : f32 to vector<8x128xf32>
    %16 = arith.subf %15, %1 : vector<8x128xf32>
    %cst_8 = arith.constant 1.000000e+00 : f32
    %17 = vector.broadcast %cst_8 : f32 to vector<8x128xf32>
    %18 = arith.subf %17, %5 : vector<8x128xf32>
    %19 = math.log %18 : vector<8x128xf32>
    %20 = arith.mulf %16, %19 : vector<8x128xf32>
    %21 = arith.addf %14, %20 : vector<8x128xf32>
    %cst_9 = arith.constant 0.000000e+00 : f32
    %22 = vector.broadcast %cst_9 : f32 to vector<8x128xf32>
    %23 = arith.subf %22, %21 : vector<8x128xf32>
    %24 = arith.mulf %12, %12 : vector<8x128xf32>
    %25 = arith.mulf %24, %23 : vector<8x128xf32>
    %cst_10 = arith.constant dense<0.000000e+00> : vector<128xf32>
    %26 = vector.multi_reduction <add>, %25, %cst_10 [0] : vector<8x128xf32> to vector<128xf32>
    %27 = vector.shape_cast %26 : vector<128xf32> to vector<1x128xf32>
    %28 = vector.shape_cast %27 : vector<1x128xf32> to vector<1x1x128xf32>
    %c0_11 = arith.constant 0 : index
    %c0_12 = arith.constant 0 : index
    %c0_13 = arith.constant 0 : index
    %29 = vector.load %arg4[%c0_11, %c0_12, %c0_13] : memref<1x1x128xf32, #tpu.memory_space<vmem>>, vector<1x1x128xf32>
    tpu.vector_store %arg4[%c0_11, %c0_12, %c0_13], %28 {strides = array<i32>} : memref<1x1x128xf32, #tpu.memory_space<vmem>>, vector<1x1x128xf32>,
    return
  }
  func.func @transform_0(%arg0: i32, %arg1: i32) -> (i32, i32) {
    %c0_i32 = arith.constant 0 : i32
    return %arg0, %arg1 : i32, i32
  }
  func.func @transform_1(%arg0: i32, %arg1: i32) -> (i32, i32) {
    %c0_i32 = arith.constant 0 : i32
    return %arg0, %arg1 : i32, i32
  }
  func.func @transform_2(%arg0: i32, %arg1: i32) -> (i32, i32, i32) {
    %c0_i32 = arith.constant 0 : i32
    %c0_i32_0 = arith.constant 0 : i32
    return %arg0, %c0_i32, %arg1 : i32, i32, i32
  }
}

</mosaic_0001>

<llo_original>
// kernel: tpu_custom_call.1
$region0: #{tpu_custom_call.1}
  #allocation0 [shape = 'u32[]', space=smem, size = 0x4, offset = 0x4, fixed_abs, tag = 'smem constant byte address 0x4 - core index']
  #allocation1 [shape = 'u32[72,128]{1,0:T(1,128)}', space=vmem, size = 0x9000, scoped, tag = 'internal scratch']
  %s0 = inlined_call_operand.hbm [shape: f32[16,128], index: 0, kind: input, shape index: {}]
  %s1 = inlined_call_operand.hbm [shape: f32[16,128], index: 1, kind: input, shape index: {}]
  %s2 = inlined_call_operand.hbm [shape: f32[2,1,128], index: 2, kind: output, shape index: {}]
  %s3 = sld [smem:[#allocation0]]
  $region49: #{tpu_custom_call.1} parent=0
    _
  %s5 = ssub.s32 1, %s3
  %s6 = scalar_select 0, %s5, %s3
  $region1: #{tpu_custom_call.1} parent=0
    #allocation2 [shape = 'u8[8192]{0}', space=vmem, size = 0x2000, scoped, tag = 'input window, operand 0']
    #allocation3 [shape = 's32[2]{0}', space=sflag, size = 0x8, scoped, tag = 'scoped memory for tpu_custom_call.1']
    #allocation4 [shape = 's32[2]{0}', space=sflag, size = 0x8, scoped, tag = 'scoped memory for tpu_custom_call.1']
    #allocation5 [shape = 'u8[8192]{0}', space=vmem, size = 0x2000, scoped, tag = 'input window, operand 1']
    #allocation6 [shape = 's32[2]{0}', space=sflag, size = 0x8, scoped, tag = 'scoped memory for tpu_custom_call.1']
    #allocation7 [shape = 'u8[1024]{0}', space=vmem, size = 0x400, scoped, tag = 'output window, operand 0']
    %7 = vsyncpa [#allocation3], 0
    %s8 = scalar_lea.sflag [#allocation3], 1
    %9 = vsyncpa %s8, 0
    %10 = vsyncpa [#allocation6], 0
    %s11 = scalar_lea.sflag [#allocation6], 1
    %12 = vsyncpa %s11, 0
    %13 = vsyncpa [#allocation4], 0
    %s14 = scalar_lea.sflag [#allocation4], 1
    %15 = vsyncpa %s14, 0
    loop: start=0, step=1, limit=4
    $region2: #{tpu_custom_call.1} parent=1 // loop_pre_header
      _
    $region3: #{tpu_custom_call.1} parent=1 // loop_header
      %s17 = sphi 0, %s21
      %p18 = scmp.ge.s32.totalorder %s17, 4
      %s24 = sphi 0, %s36
      %s25 = sphi 0, %s32
      %s26 = sphi 0, %s24
      %s27 = sphi 0, %s25
      %s28 = sphi 0, %s26
      %s29 = sphi 0, %s27
      %s41 = sphi 0, %s43
      %s44 = sphi 0, %s41
      %s45 = sphi 0, %s44
      %s61 = sphi 0, %s45
      %s69 = sphi 0, %s71
      %s72 = sphi 0, %s69
      %s73 = sphi 0, %s72
      %s89 = sphi 0, %s73
      %s97 = sphi 0, %s99
      %s100 = sphi 0, %s97
      %s101 = sphi 0, %s100
      %s117 = sphi 0, %s101
    $region4: #{tpu_custom_call.1} parent=1 // loop_header_branch
      %20 = sbr.rel (%p18) target = $region8
    $region5: #{tpu_custom_call.1} parent=1 // loop_body
      %s22 = ssub.s32 %s17, 1
      %s23 = ssub.s32 %s17, 2
      %s30 = sadd.s32 1, %s25
      %p31 = scmp.ge.s32.totalorder %s30, 1
      %s32 = scalar_select %p31, 0, %s30
      %s33 = sadd.s32 1, %s24
      %s34 = scalar_select %p31, %s33, %s24
      %p35 = scmp.ge.s32.totalorder %s34, 2
      %s36 = scalar_select %p35, 0, %s34
      %s37 = ssub.s32 %s24, %s36
      %s38 = ssub.s32 %s25, %s32
      %s39 = sor.u32 %s37, %s38
      %p40 = scmp.eq.s32.totalorder %s39, 0
      %s42 = sadd.s32 %s41, 1
      %s43 = scalar_select %p40, %s41, %s42
      %p46 = pneg %p40
      %p47 = scmp.eq.s32.totalorder %s17, 1
      %p48 = por %p46, %p47
      %p49 = scmp.ne.s32.totalorder %s41, %s44
      %p50 = scmp.eq.s32.totalorder %s17, 0
      %p51 = por %p49, %p50
      %p52 = scmp.ne.s32.totalorder %s41, %s44
      %p53 = scmp.eq.s32.totalorder %s22, 1
      %p54 = por %p52, %p53
      %p55 = scmp.ne.s32.totalorder %s44, %s45
      %p56 = scmp.eq.s32.totalorder %s22, 0
      %p57 = por %p55, %p56
      %p58 = scmp.ne.s32.totalorder %s44, %s45
      %p59 = scmp.eq.s32.totalorder %s23, 1
      %p60 = por %p58, %p59
      %p62 = scmp.ne.s32.totalorder %s45, %s61
      %p63 = scmp.eq.s32.totalorder %s23, 0
      %p64 = por %p62, %p63
      %s65 = ssub.s32 %s24, %s36
      %s66 = ssub.s32 %s25, %s32
      %s67 = sor.u32 %s65, %s66
      %p68 = scmp.eq.s32.totalorder %s67, 0
      %s70 = sadd.s32 %s69, 1
      %s71 = scalar_select %p68, %s69, %s70
      %p74 = pneg %p68
      %p75 = scmp.eq.s32.totalorder %s17, 1
      %p76 = por %p74, %p75
      %p77 = scmp.ne.s32.totalorder %s69, %s72
      %p78 = scmp.eq.s32.totalorder %s17, 0
      %p79 = por %p77, %p78
      %p80 = scmp.ne.s32.totalorder %s69, %s72
      %p81 = scmp.eq.s32.totalorder %s22, 1
      %p82 = por %p80, %p81
      %p83 = scmp.ne.s32.totalorder %s72, %s73
      %p84 = scmp.eq.s32.totalorder %s22, 0
      %p85 = por %p83, %p84
      %p86 = scmp.ne.s32.totalorder %s72, %s73
      %p87 = scmp.eq.s32.totalorder %s23, 1
      %p88 = por %p86, %p87
      %p90 = scmp.ne.s32.totalorder %s73, %s89
      %p91 = scmp.eq.s32.totalorder %s23, 0
      %p92 = por %p90, %p91
      %s93 = ssub.s32 %s24, %s36
      %s94 = ssub.s32 %s25, %s32
      %s95 = sor.u32 %s93, %s94
      %p96 = scmp.eq.s32.totalorder %s95, 0
      %s98 = sadd.s32 %s97, 1
      %s99 = scalar_select %p96, %s97, %s98
      %p102 = pneg %p96
      %p103 = scmp.eq.s32.totalorder %s17, 1
      %p104 = por %p102, %p103
      %p105 = scmp.ne.s32.totalorder %s97, %s100
      %p106 = scmp.eq.s32.totalorder %s17, 0
      %p107 = por %p105, %p106
      %p108 = scmp.ne.s32.totalorder %s97, %s100
      %p109 = scmp.eq.s32.totalorder %s22, 1
      %p110 = por %p108, %p109
      %p111 = scmp.ne.s32.totalorder %s100, %s101
      %p112 = scmp.eq.s32.totalorder %s22, 0
      %p113 = por %p111, %p112
      %p114 = scmp.ne.s32.totalorder %s100, %s101
      %p115 = scmp.eq.s32.totalorder %s23, 1
      %p116 = por %p114, %p115
      %p118 = scmp.ne.s32.totalorder %s101, %s117
      %p119 = scmp.eq.s32.totalorder %s23, 0
      %p120 = por %p118, %p119
      %p121 = scmp.le.s32.totalorder 1, %s17
      %p122 = scmp.lt.s32.totalorder %s17, 3
      %p123 = pnand %p121, %p122
      %p124 = pneg %p123
      // Predicated region
      $region9: #{tpu_custom_call.1} parent=5 // pred_check
        _
      $region10: #{tpu_custom_call.1} parent=5 // pred_check_branch
        %126 = sbr.rel (%p123) target = $region12
      $region11: #{tpu_custom_call.1} parent=5 // pred_region
        %s127 = ssub.s32 %s17, 1
      $region12: #{tpu_custom_call.1} parent=5 // pred_fallthru
        _
      %p128 = scmp.lt.s32.totalorder %s17, 2
      // Predicated region
      $region13: #{tpu_custom_call.1} parent=5 // pred_check
        %p129 = pneg %p128
      $region14: #{tpu_custom_call.1} parent=5 // pred_check_branch
        %131 = sbr.rel (%p129) target = $region16
      $region15: #{tpu_custom_call.1} parent=5 // pred_region
        // Predicated region
        $region17: #{tpu_custom_call.1} parent=15 // pred_check
          %p132 = pneg %p51
        $region18: #{tpu_custom_call.1} parent=15 // pred_check_branch
          %134 = sbr.rel (%p132) target = $region20
        $region19: #{tpu_custom_call.1} parent=15 // pred_region
          %s135 = sand.u32 %s41, 1
          %s136 = scalar_lea.sflag [#allocation3], %s135
          %s137 = sand.u32 %s41, 1
          %s138 = smul.addr %s137, 8
          %s139 = scalar_lea.vmem [#allocation2], %s138
          %141 = vsyncadd %s136, 0
          %s142 = sadd.s32 %s25, %s24
          %s143 = smul.addr %s142, 8
          %s144 = scalar_lea.hbm %s0, %s143
          %s146 = sshll.u32 %s144, 4
          %s147 = int_to_ptr.hbm [resolvable:$true] %s146
          %s148 = sshll.u32 %s139, 4
          %s149 = int_to_ptr.vmem [resolvable:$true] %s148
          %151 = dma.hbm_to_vmem [thread:$0]  %s147, 128, %s149, %s136
        $region20: #{tpu_custom_call.1} parent=15 // pred_fallthru
          _
        // Predicated region
        $region21: #{tpu_custom_call.1} parent=15 // pred_check
          %p152 = pneg %p79
        $region22: #{tpu_custom_call.1} parent=15 // pred_check_branch
          %154 = sbr.rel (%p152) target = $region24
        $region23: #{tpu_custom_call.1} parent=15 // pred_region
          %s155 = sand.u32 %s69, 1
          %s156 = scalar_lea.sflag [#allocation6], %s155
          %s157 = sand.u32 %s69, 1
          %s158 = smul.addr %s157, 8
          %s159 = scalar_lea.vmem [#allocation5], %s158
          %161 = vsyncadd %s156, 0
          %s162 = sadd.s32 %s25, %s24
          %s163 = smul.addr %s162, 8
          %s164 = scalar_lea.hbm %s1, %s163
          %s166 = sshll.u32 %s164, 4
          %s167 = int_to_ptr.hbm [resolvable:$true] %s166
          %s168 = sshll.u32 %s159, 4
          %s169 = int_to_ptr.vmem [resolvable:$true] %s168
          %171 = dma.hbm_to_vmem [thread:$0]  %s167, 128, %s169, %s156
        $region24: #{tpu_custom_call.1} parent=15 // pred_fallthru
          _
      $region16: #{tpu_custom_call.1} parent=5 // pred_fallthru
        _
      %p172 = scmp.le.s32.totalorder 1, %s17
      %p173 = scmp.lt.s32.totalorder %s17, 3
      %p174 = pnand %p172, %p173
      %p175 = pneg %p174
      // Predicated region
      $region25: #{tpu_custom_call.1} parent=5 // pred_check
        _
      $region26: #{tpu_custom_call.1} parent=5 // pred_check_branch
        %177 = sbr.rel (%p174) target = $region28
      $region27: #{tpu_custom_call.1} parent=5 // pred_region
        %s178 = ssub.s32 %s17, 1
        %s179 = sand.u32 %s44, 1
        %s180 = scalar_lea.sflag [#allocation3], %s179
        %s181 = sand.u32 %s44, 1
        %s182 = smul.addr %s181, 8
        %s183 = scalar_lea.vmem [#allocation2], %s182
        // Predicated region
        $region29: #{tpu_custom_call.1} parent=27 // pred_check
          %p184 = pneg %p57
        $region30: #{tpu_custom_call.1} parent=27 // pred_check_branch
          %186 = sbr.rel (%p184) target = $region32
        $region31: #{tpu_custom_call.1} parent=27 // pred_region
          %188 = dma.done %s180, 128
        $region32: #{tpu_custom_call.1} parent=27 // pred_fallthru
          _
        %s189 = sand.u32 %s72, 1
        %s190 = scalar_lea.sflag [#allocation6], %s189
        %s191 = sand.u32 %s72, 1
        %s192 = smul.addr %s191, 8
        %s193 = scalar_lea.vmem [#allocation5], %s192
        // Predicated region
        $region33: #{tpu_custom_call.1} parent=27 // pred_check
          %p194 = pneg %p85
        $region34: #{tpu_custom_call.1} parent=27 // pred_check_branch
          %196 = sbr.rel (%p194) target = $region36
        $region35: #{tpu_custom_call.1} parent=27 // pred_region
          %198 = dma.done %s190, 128
        $region36: #{tpu_custom_call.1} parent=27 // pred_fallthru
          _
        %s199 = sand.u32 %s44, 1
        %s200 = scalar_lea.sflag [#allocation3], %s199
        %s201 = sand.u32 %s44, 1
        %s202 = smul.addr %s201, 8
        %s203 = scalar_lea.vmem [#allocation2], %s202
        %p204 = pneg %p57
        %p205 = pneg %p54
        %s206 = sand.u32 %s72, 1
        %s207 = scalar_lea.sflag [#allocation6], %s206
        %s208 = sand.u32 %s72, 1
        %s209 = smul.addr %s208, 8
        %s210 = scalar_lea.vmem [#allocation5], %s209
        %p211 = pneg %p85
        %p212 = pneg %p82
        %p213 = pneg %p113
        %p214 = pneg %p110
        %s215 = sand.u32 %s100, 1
        %s216 = scalar_lea.sflag [#allocation4], %s215
        %s217 = sand.u32 %s100, 1
        %s218 = scalar_lea.vmem [#allocation7], %s217
        %v219 = vld [vmem:[%s183] sm:$0xff]
        %v220 = vld [vmem:[%s193] sm:$0xff]
        %v221 = vmax.f32 %v219, 1e-06
        %v222 = vmin.f32 %v221, 0.999999
        %vm223 = vcmp.eq.f32.partialorder %v220, 1.0
        %v224 = vsub.f32 1.0, %v222
        %v225 = vsel %vm223, %v222, %v224
        %v226 = vsub.f32 1.0, %v225
        %v227 = vlog2.pop %v222
        %v228 = vmul.f32 %v227, 0.6931472
        %v229 = vmul.f32 %v220, %v228
        %v230 = vsub.f32 1.0, %v220
        %v231 = vlog2.pop %v224
        %v232 = vmul.f32 %v231, 0.6931472
        %v233 = vmul.f32 %v230, %v232
        %v234 = vadd.f32 %v229, %v233
        %v235 = vsub.f32 0.0, %v234
        %v236 = vmul.f32 %v226, %v226
        %v237 = vmul.f32 %v236, %v235
        %v238 = vrot.slane %v237, 4
        %v239 = vadd.f32 %v237, %v238
        %v240 = vrot.slane %v239, 2
        %v241 = vadd.f32 %v239, %v240
        %v242 = vrot.slane %v241, 1
        %v243 = vadd.f32 %v241, %v242
        %244 = vst [vmem:[%s218] sm:$0x1] %v243
        %s245 = sand.u32 %s100, 1
        %s246 = scalar_lea.sflag [#allocation4], %s245
        %s247 = sand.u32 %s100, 1
        %s248 = scalar_lea.vmem [#allocation7], %s247
        // Predicated region
        $region37: #{tpu_custom_call.1} parent=27 // pred_check
          %p249 = pneg %p110
        $region38: #{tpu_custom_call.1} parent=27 // pred_check_branch
          %251 = sbr.rel (%p249) target = $region40
        $region39: #{tpu_custom_call.1} parent=27 // pred_region
          %253 = vsyncadd %s246, 0
          %s254 = sadd.s32 %s27, %s26
          %s255 = scalar_lea.hbm %s2, %s254
          %s257 = sshll.u32 %s248, 4
          %s258 = int_to_ptr.vmem [resolvable:$true] %s257
          %s259 = sshll.u32 %s255, 4
          %s260 = int_to_ptr.hbm [resolvable:$true] %s259
          %262 = dma.vmem_to_hbm [thread:$0]  %s258, 16, %s260, %s246
        $region40: #{tpu_custom_call.1} parent=27 // pred_fallthru
          _
      $region28: #{tpu_custom_call.1} parent=5 // pred_fallthru
        _
      %p263 = scmp.le.s32.totalorder 2, %s17
      // Predicated region
      $region41: #{tpu_custom_call.1} parent=5 // pred_check
        %p264 = pneg %p263
      $region42: #{tpu_custom_call.1} parent=5 // pred_check_branch
        %266 = sbr.rel (%p264) target = $region44
      $region43: #{tpu_custom_call.1} parent=5 // pred_region
        %s267 = ssub.s32 %s17, 2
        // Predicated region
        $region45: #{tpu_custom_call.1} parent=43 // pred_check
          %p268 = pneg %p116
        $region46: #{tpu_custom_call.1} parent=43 // pred_check_branch
          %270 = sbr.rel (%p268) target = $region48
        $region47: #{tpu_custom_call.1} parent=43 // pred_region
          %s271 = sand.u32 %s101, 1
          %s272 = scalar_lea.sflag [#allocation4], %s271
          %s273 = sand.u32 %s101, 1
          %s274 = scalar_lea.vmem [#allocation7], %s273
          %276 = dma.done %s272, 16
        $region48: #{tpu_custom_call.1} parent=43 // pred_fallthru
          _
      $region44: #{tpu_custom_call.1} parent=5 // pred_fallthru
        _
    $region6: #{tpu_custom_call.1} parent=1 // loop_footer
      %s21 = sadd.s32 1, %s17
    $region7: #{tpu_custom_call.1} parent=1 // loop_footer_branch
      %16 = sbr.rel target = $region3
    $region8: #{tpu_custom_call.1} parent=1 // loop_exit
      _
    %277 = vsyncpa [#allocation3], 1
    %s278 = scalar_lea.sflag [#allocation3], 1
    %279 = vsyncpa %s278, 1
    %280 = vsyncpa [#allocation6], 1
    %s281 = scalar_lea.sflag [#allocation6], 1
    %282 = vsyncpa %s281, 1
    %283 = vsyncpa [#allocation4], 1
    %s284 = scalar_lea.sflag [#allocation4], 1
    %285 = vsyncpa %s284, 1

</llo_original>
